<compile_context>
chip_gen: v7x
topology: tpu7x:2x2x1
jax: 0.10.0
libtpu: 0.0.40
codegen_flags: <defaults>
</compile_context>

<pallas_src>
import functools

import jax
import jax.numpy as jnp
from jax.experimental import pallas as pl
from jax.experimental.pallas import tpu as pltpu

# ~4 MiB per block; with input + output each double-buffered by the pipeline,
# total VMEM footprint ~= 4x this = 16 MiB (safe on v5e/v6e/v7x with the
# explicit vmem_limit below).
_TARGET_BLOCK_BYTES = 4 * 1024 * 1024
_VMEM_LIMIT_BYTES = 48 * 1024 * 1024
# Candidate lane widths for the 2D slab's last dim, widest first.
_LANE_WIDTHS = (1024, 512, 256, 128)


def _round_up(a: int, b: int) -> int:
    return -(-a // b) * b


def _hard_sigmoid_math(x, alpha: float, beta: float):
    # f32 compute (alpha=0.2 rounds in bf16; integer dtypes would truncate it
    # to 0), cast back to the input dtype on the way out.
    xf = x.astype(jnp.float32)
    y = jnp.clip(xf * jnp.float32(alpha) + jnp.float32(beta), 0.0, 1.0)
    return y.astype(x.dtype)


def _make_hardsigmoid_kernel(alpha: float, beta: float):
    def kernel(x_ref, o_ref):
        o_ref[...] = _hard_sigmoid_math(x_ref[...], alpha, beta)

    return kernel


@functools.partial(jax.jit, static_argnames=("alpha", "beta"))
def onnx_hard_sigmoid(x: jax.Array, alpha: float = 0.2, beta: float = 0.5) -> jax.Array:
    """Pallas implementation of ONNX HardSigmoid: clip(alpha*x + beta, 0, 1)."""
    orig_shape = x.shape
    dtype = x.dtype
    n = int(x.size)
    itemsize = dtype.itemsize
    alpha = float(alpha)
    beta = float(beta)

    if n == 0:
        return x

    # Packed-sublane multiple: 8 rows for 32-bit, 16 for bf16/f16, 32 for int8/fp8.
    sub = max(8, 32 // max(1, itemsize))

    # Widest lane width that exactly divides n -> no tail, no slice/concat copies.
    lane_w = None
    for w in _LANE_WIDTHS:
        if n >= w and n % w == 0:
            lane_w = w
            break
    if lane_w is None:
        # n not a multiple of 128 (or tiny).  A fused jnp elementwise op is a
        # single streaming pass (the 2-pass minimum) and strictly cheaper than
        # any slice + kernel + concat split, so use it for this rare case.
        return _hard_sigmoid_math(x, alpha, beta)

    rows = n // lane_w
    x2d = x.reshape(rows, lane_w)  # free bitcast under jit

    if rows <= sub:
        # Single full-extent block (always a legal block shape).
        block_rows = rows
        grid_n = 1
    else:
        # ~_TARGET_BLOCK_BYTES per block, multiple of `sub` sublanes; the last
        # grid block may be ragged (Pallas masks it).  Force an even number of
        # near-equal blocks so v7x's two TensorCores stay balanced.
        target_rows = max(sub, (_TARGET_BLOCK_BYTES // (lane_w * itemsize)) // sub * sub)
        nblocks = max(1, -(-rows // target_rows))
        if nblocks % 2:
            nblocks += 1
        nblocks = min(nblocks, max(1, rows // sub))  # keep >= sub rows per block
        block_rows = _round_up(-(-rows // nblocks), sub)
        block_rows = min(block_rows, rows)
        grid_n = -(-rows // block_rows)

    kernel = _make_hardsigmoid_kernel(alpha, beta)

    out2d = pl.pallas_call(
        kernel,
        out_shape=jax.ShapeDtypeStruct((rows, lane_w), dtype),
        grid_spec=pltpu.PrefetchScalarGridSpec(
            num_scalar_prefetch=0,
            grid=(grid_n,),
            in_specs=[pl.BlockSpec((block_rows, lane_w), lambda i: (i, 0))],
            out_specs=pl.BlockSpec((block_rows, lane_w), lambda i: (i, 0)),
        ),
        compiler_params=pltpu.CompilerParams(
            dimension_semantics=("parallel",),
            vmem_limit_bytes=_VMEM_LIMIT_BYTES,
        ),
    )(x2d)

    return out2d.reshape(orig_shape)


def _reference(x, alpha=0.2, beta=0.5):
    return jnp.clip(x.astype(jnp.float32) * alpha + beta, 0.0, 1.0).astype(x.dtype)


if __name__ == "__main__":
    key = jax.random.PRNGKey(0)

    # Primary test: NCHW input matching the PyTorch module's convention.
    x = jax.random.normal(key, (2, 4, 16, 16), dtype=jnp.float32) * 5.0
    y = jax.block_until_ready(onnx_hard_sigmoid(x, alpha=0.2, beta=0.5))
    assert y.shape == x.shape and y.dtype == x.dtype
    assert jnp.allclose(y, _reference(x), atol=1e-6), "mismatch vs reference (f32)"

    # Multi-block path with a ragged (masked) last block: n = 3840 = 30 * 128.
    k2, k3 = jax.random.split(key)
    x2 = jax.random.normal(k2, (2, 3, 20, 32), dtype=jnp.float32) * 3.0
    y2 = jax.block_until_ready(onnx_hard_sigmoid(x2))
    assert jnp.allclose(y2, _reference(x2), atol=1e-6), "mismatch vs reference (ragged)"

    # n not a multiple of 128 -> fused jnp fallback path (2 HBM passes).
    x3 = jax.random.normal(k3, (2, 4, 15, 15), dtype=jnp.float32) * 3.0
    y3 = jax.block_until_ready(onnx_hard_sigmoid(x3))
    assert jnp.allclose(y3, _reference(x3), atol=1e-6), "mismatch vs reference (fallback)"

    print("KERNEL_OK")
</pallas_src>

<mosaic_0001>
module attributes {stable_mosaic.version = 11 : i64} {
  func.func @kernel(%arg0: i32, %arg1: memref<2x1024xf32, #tpu.memory_space<vmem>>, %arg2: memref<2x1024xf32, #tpu.memory_space<vmem>>) attributes {dimension_semantics = [#tpu.dimension_semantics<parallel>], iteration_bounds = array<i64: 1>, scalar_prefetch = 0 : i64, scratch_operands = 0 : i64, tpu.core_type = #tpu.core_type<tc>, window_params = [{transform_indices = @transform_0, window_bounds = array<i64: 2, 1024>}, {transform_indices = @transform_1, window_bounds = array<i64: 2, 1024>}]} {
    %c0 = arith.constant 0 : index
    %c0_0 = arith.constant 0 : index
    %0 = vector.load %arg1[%c0, %c0_0] : memref<2x1024xf32, #tpu.memory_space<vmem>>, vector<2x1024xf32>
    %cst = arith.constant 2.000000e-01 : f32
    %1 = vector.broadcast %cst : f32 to vector<2x1024xf32>
    %2 = arith.mulf %0, %1 : vector<2x1024xf32>
    %cst_1 = arith.constant 5.000000e-01 : f32
    %3 = vector.broadcast %cst_1 : f32 to vector<2x1024xf32>
    %4 = arith.addf %2, %3 : vector<2x1024xf32>
    %cst_2 = arith.constant 0.000000e+00 : f32
    %cst_3 = arith.constant 1.000000e+00 : f32
    %5 = vector.broadcast %cst_2 : f32 to vector<2x1024xf32>
    %6 = arith.maximumf %5, %4 : vector<2x1024xf32>
    %7 = vector.broadcast %cst_3 : f32 to vector<2x1024xf32>
    %8 = arith.minimumf %7, %6 : vector<2x1024xf32>
    %c0_4 = arith.constant 0 : index
    %c0_5 = arith.constant 0 : index
    %9 = vector.load %arg2[%c0_4, %c0_5] : memref<2x1024xf32, #tpu.memory_space<vmem>>, vector<2x1024xf32>
    tpu.vector_store %arg2[%c0_4, %c0_5], %8 {strides = array<i32>} : memref<2x1024xf32, #tpu.memory_space<vmem>>, vector<2x1024xf32>,
    return
  }
  func.func @transform_0(%arg0: i32) -> (i32, i32) {
    %c0_i32 = arith.constant 0 : i32
    %c0_i32_0 = arith.constant 0 : i32
    return %arg0, %c0_i32 : i32, i32
  }
  func.func @transform_1(%arg0: i32) -> (i32, i32) {
    %c0_i32 = arith.constant 0 : i32
    %c0_i32_0 = arith.constant 0 : i32
    return %arg0, %c0_i32 : i32, i32
  }
}

</mosaic_0001>

<llo_original>
// kernel: onnx_hard_sigmoid.1
$region0: #{onnx_hard_sigmoid.1}
  #allocation0 [shape = 'u32[]', space=smem, size = 0x4, offset = 0x4, fixed_abs, tag = 'smem constant byte address 0x4 - core index']
  #allocation1 [shape = 'u32[144,128]{1,0:T(1,128)}', space=vmem, size = 0x12000, scoped, tag = 'internal scratch']
  %s0 = inlined_call_operand.vmem [shape: f32[2,1024], index: 0, kind: input, shape index: {}]
  %s1 = inlined_call_operand.vmem [shape: f32[2,1024], index: 1, kind: output, shape index: {}]
  %s2 = sld [smem:[#allocation0]]
  $region14: #{onnx_hard_sigmoid.1} parent=0
    _
  %s4 = ssub.s32 1, %s2
  %s5 = scalar_select 0, %s4, %s2
  // Predicated region
  $region2: #{onnx_hard_sigmoid.1} parent=0 // pred_check
    _
  $region3: #{onnx_hard_sigmoid.1} parent=0 // pred_check_branch
    %7 = sbr.rel (0) target = $region5
  $region4: #{onnx_hard_sigmoid.1} parent=0 // pred_region
    _
  $region5: #{onnx_hard_sigmoid.1} parent=0 // pred_fallthru
    _
  %v8 = vld [vmem:[%s0] sm:$0xff]
  %v9 = vld [vmem:[%s0 + $0x8] sm:$0xff]
  %v10 = vmul.f32 %v8, 0.2
  %v11 = vmul.f32 %v9, 0.2
  %v12 = vadd.f32 %v10, 0.5
  %v13 = vadd.f32 %v11, 0.5
  %v14 = vmax.f32 %v12, 0.0
  %v15 = vmax.f32 %v13, 0.0
  %v16 = vmin.f32 %v14, 1.0
  %v17 = vmin.f32 %v15, 1.0
  %18 = vst [vmem:[%s1] sm:$0xff] %v16
  %19 = vst [vmem:[%s1 + $0x8] sm:$0xff] %v17
  // Predicated region
  $region6: #{onnx_hard_sigmoid.1} parent=0 // pred_check
    _
  $region7: #{onnx_hard_sigmoid.1} parent=0 // pred_check_branch
    %21 = sbr.rel (0) target = $region9
  $region8: #{onnx_hard_sigmoid.1} parent=0 // pred_region
    _
  $region9: #{onnx_hard_sigmoid.1} parent=0 // pred_fallthru
    _
  // Predicated region
  $region10: #{onnx_hard_sigmoid.1} parent=0 // pred_check
    _
  $region11: #{onnx_hard_sigmoid.1} parent=0 // pred_check_branch
    %23 = sbr.rel (0) target = $region13
  $region12: #{onnx_hard_sigmoid.1} parent=0 // pred_region
    _
  $region13: #{onnx_hard_sigmoid.1} parent=0 // pred_fallthru
    _

</llo_original>
